<compile_context>
chip_gen: v7x
topology: tpu7x:2x2x1
jax: 0.10.0
libtpu: 0.0.40
codegen_flags: <defaults>
</compile_context>

<pallas_src>
import functools

import jax
import jax.numpy as jnp
from jax.experimental import pallas as pl
from jax.experimental.pallas import tpu as pltpu


TM_MAX = 1024  # rows of the original [M, Cout] output processed per grid step


# ----------------------------------------------------------------------------
# Pallas kernel: single fused matmul + bias (+ optional ReLU)
# ----------------------------------------------------------------------------
def _fused_linear_kernel(x_ref, w_ref, b_ref, o_ref, *, apply_relu):
    acc = jnp.dot(x_ref[...], w_ref[...], preferred_element_type=jnp.float32)
    acc = acc + b_ref[...]
    if apply_relu:
        acc = jnp.maximum(acc, 0.0)
    o_ref[...] = acc.astype(o_ref.dtype)


def _round_up(x, m):
    return (x + m - 1) // m * m


def fused_linear(x_flat, w_eff, b_eff, *, apply_relu=False, tm_max=TM_MAX,
                 mxu_dtype=None):
    """x_flat: [M, K] f32, w_eff: [K, Cout], b_eff: [1, Cout] -> [M, Cout] f32."""
    M, K = x_flat.shape
    cout = w_eff.shape[-1]

    # Lane-dense output: fuse `pack` consecutive rows into one 128-lane row.
    pack = 128 // cout if (cout < 128 and 128 % cout == 0) else 1

    row_quant = 8 * pack
    tm = max(row_quant, min(_round_up(tm_max, row_quant), _round_up(M, row_quant)))
    m_pad = _round_up(M, tm)
    if m_pad != M:
        x_flat = jnp.pad(x_flat, ((0, m_pad - M), (0, 0)))

    if pack > 1:
        eye = jnp.eye(pack, dtype=w_eff.dtype)
        # Block-diagonal weight: (p*K + k, q*Cout + c) = eye[p,q] * w_eff[k,c]
        w_call = jnp.einsum("pq,kc->pkqc", eye, w_eff).reshape(pack * K, pack * cout)
        b_call = jnp.tile(b_eff, (1, pack))
        x_call = x_flat.reshape(m_pad // pack, pack * K)  # free row-major view
    else:
        w_call, b_call, x_call = w_eff, b_eff, x_flat

    if mxu_dtype is not None:  # optional bf16 MXU path (v6e/v7x), f32 accumulation
        x_call = x_call.astype(mxu_dtype)
        w_call = w_call.astype(mxu_dtype)

    rows, kp = x_call.shape
    np_ = pack * cout
    tr = tm // pack

    out = pl.pallas_call(
        functools.partial(_fused_linear_kernel, apply_relu=apply_relu),
        out_shape=jax.ShapeDtypeStruct((rows, np_), jnp.float32),
        grid_spec=pltpu.PrefetchScalarGridSpec(
            num_scalar_prefetch=0,
            grid=(rows // tr,),
            in_specs=[
                pl.BlockSpec((tr, kp), lambda i: (i, 0)),
                pl.BlockSpec((kp, np_), lambda i: (0, 0)),  # resident weight
                pl.BlockSpec((1, np_), lambda i: (0, 0)),   # resident bias
            ],
            out_specs=pl.BlockSpec((tr, np_), lambda i: (i, 0)),
        ),
        compiler_params=pltpu.CompilerParams(
            dimension_semantics=("parallel",),  # shard rows across TCs on v7x
        ),
    )(x_call, w_call, b_call)

    return out.reshape(m_pad, cout)[:M]


# ----------------------------------------------------------------------------
# Collapse the activation-free 3-conv stack into one effective weight/bias
# ----------------------------------------------------------------------------
def _collapse_conv_stack(w1, b1, w2, b2, w3, b3):
    """w*: [2, Cin_l, Cout_l], b*: [1, Cout_l] -> W_eff [8*Cin, Cout], b_eff [1, Cout]."""
    cin, cout = w1.shape[1], w3.shape[2]
    # W_eff[n] = w1[n%2] @ w2[(n//2)%2] @ w3[n//4]; flat order (j3, j2, j1, cin).
    w_eff = jnp.einsum("pij,qjk,rkl->rqpil", w1, w2, w3).reshape(8 * cin, cout)
    w3s = w3[0] + w3[1]
    b_eff = b1 @ (w2[0] + w2[1]) @ w3s + b2 @ w3s + b3
    return w_eff, b_eff


def sift_conv_stack(grouped, layer_params, *, apply_relu=False, tm_max=TM_MAX,
                    mxu_dtype=None):
    """grouped: [M, 8, Cin] -> [M, Cout] (3x Conv2d [1,2]/[1,2], no inner act)."""
    M, eight, cin = grouped.shape
    assert eight == 8
    w_eff, b_eff = _collapse_conv_stack(*layer_params)
    return fused_linear(grouped.reshape(M, eight * cin), w_eff, b_eff,
                        apply_relu=apply_relu, tm_max=tm_max, mxu_dtype=mxu_dtype)


# ----------------------------------------------------------------------------
# PointSIFT neighbor selection + gather (data-dependent indexing; plain JAX)
# ----------------------------------------------------------------------------
# TODO(synk): octant argmin-selection + gather is data-dependent O(N^2) indexing;
# kept in plain JAX (XLA) rather than forcing a Pallas gather.
def pointsift_select(radius, xyz):
    """xyz: [B, N, 3] -> idx [B, N, 8] (one neighbor per octant, self if none)."""
    B, N, _ = xyz.shape
    judge = radius ** 2
    diff = xyz[:, None, :, :] - xyz[:, :, None, :]                        # [B,N,N,3]
    dist = jnp.sum(diff * diff, axis=-1)                                  # [B,N,N]
    sub = jnp.sum(
        jnp.trunc(diff + 1.0).astype(jnp.int32) * jnp.array([4, 2, 1], jnp.int32),
        axis=-1,
    )                                                                     # [B,N,N]
    valid = (dist > 1e-10) & (dist < judge)
    octs = jnp.arange(8, dtype=jnp.int32)
    distance = jnp.where(
        (sub[..., None] == octs) & valid[..., None], dist[..., None], 1e10
    )                                                                     # [B,N,N,8]
    eye = jnp.eye(N, dtype=bool)
    distance = jnp.where(eye[None, :, :, None], judge, distance)
    return jnp.argmin(distance, axis=2)                                   # [B,N,8]


def index_points(points, idx):
    """points: [B, N, C], idx: [B, N, 8] -> [B, N, 8, C]"""
    B = points.shape[0]
    b_idx = jnp.arange(B)[:, None, None]
    return points[b_idx, idx, :]


# ----------------------------------------------------------------------------
# Module parameters (deterministic init) + forward
# ----------------------------------------------------------------------------
def init_params(key, output_channel, extra_input_channel):
    cin1 = 3 + extra_input_channel
    cin2 = 3 + output_channel
    ks = jax.random.split(key, 12)

    def w(k, ci, co):
        return jax.random.normal(k, (2, ci, co), jnp.float32) * 0.1

    def b(k, co):
        return jax.random.normal(k, (1, co), jnp.float32) * 0.1

    return {
        "c1": (w(ks[0], cin1, output_channel), b(ks[1], output_channel),
               w(ks[2], output_channel, output_channel), b(ks[3], output_channel),
               w(ks[4], output_channel, output_channel), b(ks[5], output_channel)),
        "c2": (w(ks[6], cin2, output_channel), b(ks[7], output_channel),
               w(ks[8], output_channel, output_channel), b(ks[9], output_channel),
               w(ks[10], output_channel, output_channel), b(ks[11], output_channel)),
    }


@functools.partial(jax.jit, static_argnames=("radius",))
def pointsift_res_forward(xyz, points, params, radius):
    """xyz: [B, T, N, 3], points: [B, T, N, C_extra] (merge='concat', same_dim=False)."""
    B, T, N, C = xyz.shape
    bt = B * T
    xyz2 = xyz.reshape(bt, N, C)
    pts = points.reshape(bt, N, -1)

    idx = pointsift_select(radius, xyz2)                                  # [bt,N,8]
    g_xyz = index_points(xyz2, idx) - xyz2[:, :, None, :]                 # [bt,N,8,3]
    g_pts = jnp.concatenate([g_xyz, index_points(pts, idx)], axis=-1)     # [bt,N,8,3+Ce]

    new_pts = sift_conv_stack(g_pts.reshape(bt * N, 8, g_pts.shape[-1]), params["c1"])
    cout = new_pts.shape[-1]
    new_pts = new_pts.reshape(bt, N, cout)

    g_pts2 = jnp.concatenate([g_xyz, index_points(new_pts, idx)], axis=-1)
    # ReLU of the conv branch fused into the kernel (relu distributes over concat).
    new_pts2 = sift_conv_stack(g_pts2.reshape(bt * N, 8, g_pts2.shape[-1]),
                               params["c2"], apply_relu=True)
    new_pts2 = new_pts2.reshape(bt, N, cout)

    # merge='concat' along channel dim, then ReLU (channels-last here).
    out = jnp.concatenate([new_pts2, jax.nn.relu(pts)], axis=-1)
    return xyz, out.reshape(B, T, N, -1)


# ----------------------------------------------------------------------------
# Pure-JAX layered reference (un-collapsed) for a correctness check
# ----------------------------------------------------------------------------
def _conv_stack_reference(x, layer_params):
    w1, b1, w2, b2, w3, b3 = layer_params
    h1 = [x[:, 2 * j] @ w1[0] + x[:, 2 * j + 1] @ w1[1] + b1 for j in range(4)]
    h2 = [h1[2 * j] @ w2[0] + h1[2 * j + 1] @ w2[1] + b2 for j in range(2)]
    return h2[0] @ w3[0] + h2[1] @ w3[1] + b3


def pointsift_res_reference(xyz, points, params, radius):
    B, T, N, C = xyz.shape
    bt = B * T
    xyz2 = xyz.reshape(bt, N, C)
    pts = points.reshape(bt, N, -1)
    idx = pointsift_select(radius, xyz2)
    g_xyz = index_points(xyz2, idx) - xyz2[:, :, None, :]
    g_pts = jnp.concatenate([g_xyz, index_points(pts, idx)], axis=-1)
    new_pts = _conv_stack_reference(g_pts.reshape(bt * N, 8, -1), params["c1"])
    cout = new_pts.shape[-1]
    new_pts = new_pts.reshape(bt, N, cout)
    g_pts2 = jnp.concatenate([g_xyz, index_points(new_pts, idx)], axis=-1)
    new_pts2 = _conv_stack_reference(g_pts2.reshape(bt * N, 8, -1), params["c2"])
    out = jax.nn.relu(jnp.concatenate([new_pts2.reshape(bt, N, cout), pts], axis=-1))
    return xyz, out.reshape(B, T, N, -1)


if __name__ == "__main__":
    B, T, N = 2, 2, 16
    extra_input_channel = 3
    output_channel = 64
    radius = 0.5

    key = jax.random.PRNGKey(0)
    k_xyz, k_pts, k_par = jax.random.split(key, 3)
    xyz = jax.random.uniform(k_xyz, (B, T, N, 3), jnp.float32)
    points = jax.random.normal(k_pts, (B, T, N, extra_input_channel), jnp.float32)
    params = init_params(k_par, output_channel, extra_input_channel)

    xyz_out, new_points = pointsift_res_forward(xyz, points, params, radius)
    jax.block_until_ready((xyz_out, new_points))

    assert xyz_out.shape == (B, T, N, 3)
    assert new_points.shape == (B, T, N, output_channel + extra_input_channel)

    # correctness check vs. un-collapsed pure-JAX reference
    _, ref_points = pointsift_res_reference(xyz, points, params, radius)
    jax.block_until_ready(ref_points)
    assert jnp.allclose(new_points, ref_points, rtol=1e-3, atol=1e-3), (
        float(jnp.max(jnp.abs(new_points - ref_points)))
    )

    print("KERNEL_OK")
</pallas_src>

<mosaic_0001>
module attributes {stable_mosaic.version = 11 : i64} {
  func.func @_fused_linear_kernel(%arg0: i32, %arg1: memref<32x96xf32, #tpu.memory_space<vmem>>, %arg2: memref<96x128xf32, #tpu.memory_space<vmem>>, %arg3: memref<1x128xf32, #tpu.memory_space<vmem>>, %arg4: memref<32x128xf32, #tpu.memory_space<vmem>>) attributes {dimension_semantics = [#tpu.dimension_semantics<parallel>], iteration_bounds = array<i64: 1>, scalar_prefetch = 0 : i64, scratch_operands = 0 : i64, tpu.core_type = #tpu.core_type<tc>, window_params = [{transform_indices = @transform_0, window_bounds = array<i64: 32, 96>}, {pipeline_mode = #tpu.pipeline_mode<synchronous>, transform_indices = @transform_1, window_bounds = array<i64: 96, 128>}, {pipeline_mode = #tpu.pipeline_mode<synchronous>, transform_indices = @transform_2, window_bounds = array<i64: 1, 128>}, {transform_indices = @transform_3, window_bounds = array<i64: 32, 128>}]} {
    %c0 = arith.constant 0 : index
    %c0_0 = arith.constant 0 : index
    %0 = vector.load %arg1[%c0, %c0_0] : memref<32x96xf32, #tpu.memory_space<vmem>>, vector<32x96xf32>
    %c0_1 = arith.constant 0 : index
    %c0_2 = arith.constant 0 : index
    %1 = vector.load %arg2[%c0_1, %c0_2] : memref<96x128xf32, #tpu.memory_space<vmem>>, vector<96x128xf32>
    %cst = arith.constant dense<0.000000e+00> : vector<32x128xf32>
    %2 = tpu.matmul %0, %1, %cst {dimension_numbers = #tpu.dot_dimension_numbers<[1], [0], [0], [1], [0, 0, 1, 1], [], []>} : vector<32x96xf32>, vector<96x128xf32>, vector<32x128xf32> -> vector<32x128xf32>
    %c0_3 = arith.constant 0 : index
    %c0_4 = arith.constant 0 : index
    %3 = vector.load %arg3[%c0_3, %c0_4] : memref<1x128xf32, #tpu.memory_space<vmem>>, vector<1x128xf32>
    %4 = vector.broadcast %3 : vector<1x128xf32> to vector<32x128xf32>
    %5 = arith.addf %2, %4 : vector<32x128xf32>
    %c0_5 = arith.constant 0 : index
    %c0_6 = arith.constant 0 : index
    %6 = vector.load %arg4[%c0_5, %c0_6] : memref<32x128xf32, #tpu.memory_space<vmem>>, vector<32x128xf32>
    tpu.vector_store %arg4[%c0_5, %c0_6], %5 {strides = array<i32>} : memref<32x128xf32, #tpu.memory_space<vmem>>, vector<32x128xf32>,
    return
  }
  func.func @transform_0(%arg0: i32) -> (i32, i32) {
    %c0_i32 = arith.constant 0 : i32
    %c0_i32_0 = arith.constant 0 : i32
    return %arg0, %c0_i32 : i32, i32
  }
  func.func @transform_1(%arg0: i32) -> (i32, i32) {
    %c0_i32 = arith.constant 0 : i32
    %c0_i32_0 = arith.constant 0 : i32
    %c0_i32_1 = arith.constant 0 : i32
    return %c0_i32, %c0_i32_0 : i32, i32
  }
  func.func @transform_2(%arg0: i32) -> (i32, i32) {
    %c0_i32 = arith.constant 0 : i32
    %c0_i32_0 = arith.constant 0 : i32
    %c0_i32_1 = arith.constant 0 : i32
    return %c0_i32, %c0_i32_0 : i32, i32
  }
  func.func @transform_3(%arg0: i32) -> (i32, i32) {
    %c0_i32 = arith.constant 0 : i32
    %c0_i32_0 = arith.constant 0 : i32
    return %arg0, %c0_i32 : i32, i32
  }
}

module attributes {stable_mosaic.version = 11 : i64} {
  func.func @_fused_linear_kernel(%arg0: i32, %arg1: memref<32x1072xf32, #tpu.memory_space<vmem>>, %arg2: memref<1072x128xf32, #tpu.memory_space<vmem>>, %arg3: memref<1x128xf32, #tpu.memory_space<vmem>>, %arg4: memref<32x128xf32, #tpu.memory_space<vmem>>) attributes {dimension_semantics = [#tpu.dimension_semantics<parallel>], iteration_bounds = array<i64: 1>, scalar_prefetch = 0 : i64, scratch_operands = 0 : i64, tpu.core_type = #tpu.core_type<tc>, window_params = [{transform_indices = @transform_0, window_bounds = array<i64: 32, 1072>}, {pipeline_mode = #tpu.pipeline_mode<synchronous>, transform_indices = @transform_1, window_bounds = array<i64: 1072, 128>}, {pipeline_mode = #tpu.pipeline_mode<synchronous>, transform_indices = @transform_2, window_bounds = array<i64: 1, 128>}, {transform_indices = @transform_3, window_bounds = array<i64: 32, 128>}]} {
    %c0 = arith.constant 0 : index
    %c0_0 = arith.constant 0 : index
    %0 = vector.load %arg1[%c0, %c0_0] : memref<32x1072xf32, #tpu.memory_space<vmem>>, vector<32x1072xf32>
    %c0_1 = arith.constant 0 : index
    %c0_2 = arith.constant 0 : index
    %1 = vector.load %arg2[%c0_1, %c0_2] : memref<1072x128xf32, #tpu.memory_space<vmem>>, vector<1072x128xf32>
    %cst = arith.constant dense<0.000000e+00> : vector<32x128xf32>
    %2 = tpu.matmul %0, %1, %cst {dimension_numbers = #tpu.dot_dimension_numbers<[1], [0], [0], [1], [0, 0, 1, 1], [], []>} : vector<32x1072xf32>, vector<1072x128xf32>, vector<32x128xf32> -> vector<32x128xf32>
    %c0_3 = arith.constant 0 : index
    %c0_4 = arith.constant 0 : index
    %3 = vector.load %arg3[%c0_3, %c0_4] : memref<1x128xf32, #tpu.memory_space<vmem>>, vector<1x128xf32>
    %4 = vector.broadcast %3 : vector<1x128xf32> to vector<32x128xf32>
    %5 = arith.addf %2, %4 : vector<32x128xf32>
    %cst_5 = arith.constant 0.000000e+00 : f32
    %6 = vector.broadcast %cst_5 : f32 to vector<32x128xf32>
    %7 = arith.maximumf %5, %6 : vector<32x128xf32>
    %c0_6 = arith.constant 0 : index
    %c0_7 = arith.constant 0 : index
    %8 = vector.load %arg4[%c0_6, %c0_7] : memref<32x128xf32, #tpu.memory_space<vmem>>, vector<32x128xf32>
    tpu.vector_store %arg4[%c0_6, %c0_7], %7 {strides = array<i32>} : memref<32x128xf32, #tpu.memory_space<vmem>>, vector<32x128xf32>,
    return
  }
  func.func @transform_0(%arg0: i32) -> (i32, i32) {
    %c0_i32 = arith.constant 0 : i32
    %c0_i32_0 = arith.constant 0 : i32
    return %arg0, %c0_i32 : i32, i32
  }
  func.func @transform_1(%arg0: i32) -> (i32, i32) {
    %c0_i32 = arith.constant 0 : i32
    %c0_i32_0 = arith.constant 0 : i32
    %c0_i32_1 = arith.constant 0 : i32
    return %c0_i32, %c0_i32_0 : i32, i32
  }
  func.func @transform_2(%arg0: i32) -> (i32, i32) {
    %c0_i32 = arith.constant 0 : i32
    %c0_i32_0 = arith.constant 0 : i32
    %c0_i32_1 = arith.constant 0 : i32
    return %c0_i32, %c0_i32_0 : i32, i32
  }
  func.func @transform_3(%arg0: i32) -> (i32, i32) {
    %c0_i32 = arith.constant 0 : i32
    %c0_i32_0 = arith.constant 0 : i32
    return %arg0, %c0_i32 : i32, i32
  }
}

</mosaic_0001>

<llo_original>
// kernel: pointsift_res_forward.2
$region0: #{pointsift_res_forward.2}
  #allocation0 [shape = 'u32[]', space=smem, size = 0x4, offset = 0x4, fixed_abs, tag = 'smem constant byte address 0x4 - core index']
  #allocation1 [shape = 'u32[144,128]{1,0:T(1,128)}', space=vmem, size = 0x12000, scoped, tag = 'internal scratch']
  %s0 = inlined_call_operand.vmem [shape: f32[32,96], index: 0, kind: input, shape index: {}]
  %s1 = inlined_call_operand.vmem [shape: f32[96,128], index: 1, kind: input, shape index: {}]
  %s2 = inlined_call_operand.vmem [shape: f32[1,128], index: 2, kind: input, shape index: {}]
  %s3 = inlined_call_operand.vmem [shape: f32[32,128], index: 3, kind: output, shape index: {}]
  %s4 = sld [smem:[#allocation0]]
  $region22: #{pointsift_res_forward.2} parent=0
    _
  %s6 = ssub.s32 1, %s4
  %s7 = scalar_select 0, %s6, %s4
  // Predicated region
  $region2: #{pointsift_res_forward.2} parent=0 // pred_check
    _
  $region3: #{pointsift_res_forward.2} parent=0 // pred_check_branch
    %9 = sbr.rel (0) target = $region5
  $region4: #{pointsift_res_forward.2} parent=0 // pred_region
    _
  $region5: #{pointsift_res_forward.2} parent=0 // pred_fallthru
    _
  // Predicated region
  $region6: #{pointsift_res_forward.2} parent=0 // pred_check
    _
  $region7: #{pointsift_res_forward.2} parent=0 // pred_check_branch
    %11 = sbr.rel (0) target = $region9
  $region8: #{pointsift_res_forward.2} parent=0 // pred_region
    _
  $region9: #{pointsift_res_forward.2} parent=0 // pred_fallthru
    _
  // Predicated region
  $region10: #{pointsift_res_forward.2} parent=0 // pred_check
    _
  $region11: #{pointsift_res_forward.2} parent=0 // pred_check_branch
    %13 = sbr.rel (0) target = $region13
  $region12: #{pointsift_res_forward.2} parent=0 // pred_region
    _
  $region13: #{pointsift_res_forward.2} parent=0 // pred_fallthru
    _
  %v14 = vld [vmem:[%s0] sm:$0xff]
  %v15 = vld [vmem:[%s0 + $0x8] sm:$0xff]
  %v16 = vld [vmem:[%s0 + $0x10] sm:$0xff]
  %v17 = vld [vmem:[%s0 + $0x18] sm:$0xff]
  %v18 = vld [vmem:[%s1] sm:$0xff]
  %v19 = vld [vmem:[%s1 + $0x8] sm:$0xff]
  %v20 = vld [vmem:[%s1 + $0x10] sm:$0xff]
  %v21 = vld [vmem:[%s1 + $0x18] sm:$0xff]
  %v22 = vld [vmem:[%s1 + $0x20] sm:$0xff]
  %v23 = vld [vmem:[%s1 + $0x28] sm:$0xff]
  %v24 = vld [vmem:[%s1 + $0x30] sm:$0xff]
  %v25 = vld [vmem:[%s1 + $0x38] sm:$0xff]
  %v26 = vld [vmem:[%s1 + $0x40] sm:$0xff]
  %v27 = vld [vmem:[%s1 + $0x48] sm:$0xff]
  %v28 = vld [vmem:[%s1 + $0x50] sm:$0xff]
  %v29 = vld [vmem:[%s1 + $0x58] sm:$0xff]
  %v30 = vld [vmem:[%s2] sm:$0x1]
  %v32 = vlaneseq
  %v33 = vshrl.u32 %v32, 7
  %v34 = vsub.s32 0, %v33
  %v35 = vrot.slane %v30, %v34
  %vm37 = vcmask 785408
  %v39 = vsel %vm37, %v14, 0
  %v42 = vsel %vm37, %v15, 0
  %v45 = vsel %vm37, %v16, 0
  %v48 = vsel %vm37, %v17, 0
  %50 = vmatprep.subr.mxu0 0.0
  %51 = vmatpush1.msra.mxu0 %v18
  %52 = vmatprep.subr.mxu0 0.0
  %53 = vmatpush1.msra.mxu0 %v19
  %54 = vmatprep.subr.mxu0 0.0
  %55 = vmatpush1.msra.mxu0 %v20
  %56 = vmatprep.subr.mxu0 0.0
  %57 = vmatpush1.msra.mxu0 %v21
  %58 = vmatprep.subr.mxu0 0.0
  %59 = vmatpush1.msra.mxu0 %v22
  %60 = vmatprep.subr.mxu0 0.0
  %61 = vmatpush1.msra.mxu0 %v23
  %62 = vmatprep.subr.mxu0 0.0
  %63 = vmatpush1.msra.mxu0 %v24
  %64 = vmatprep.subr.mxu0 0.0
  %65 = vmatpush1.msra.mxu0 %v25
  %66 = vmatprep.subr.mxu0 0.0
  %67 = vmatpush1.msra.mxu0 %v26
  %68 = vmatprep.subr.mxu0 0.0
  %69 = vmatpush1.msra.mxu0 %v27
  %70 = vmatprep.subr.mxu0 0.0
  %71 = vmatpush1.msra.mxu0 %v28
  %72 = vmatprep.subr.mxu0 0.0
  %73 = vmatpush1.msra.mxu0 %v29
  %74 = vmatprep.subr.mxu0 0.0
  %75 = vmatpush1.msra.mxu0 0.0
  %76 = vmatprep.subr.mxu0 0.0
  %77 = vmatpush1.msra.mxu0 0.0
  %78 = vmatprep.subr.mxu0 0.0
  %79 = vmatpush1.msra.mxu0 0.0
  %80 = vmatprep.subr.mxu0 0.0
  %81 = vmatpush1.msra.mxu0 0.0
  %82 = vmatprep.subr.mxu0 0.0
  %83 = vmatpush1.msra.mxu0 0.0
  %84 = vmatprep.subr.mxu0 0.0
  %85 = vmatpush1.msra.mxu0 0.0
  %86 = vmatprep.subr.mxu0 0.0
  %87 = vmatpush1.msra.mxu0 0.0
  %88 = vmatprep.subr.mxu0 0.0
  %89 = vmatpush1.msra.mxu0 0.0
  %90 = vmatprep.subr.mxu0 0.0
  %91 = vmatpush1.msra.mxu0 0.0
  %92 = vmatprep.subr.mxu0 0.0
  %93 = vmatpush1.msra.mxu0 0.0
  %94 = vmatprep.subr.mxu0 0.0
  %95 = vmatpush1.msra.mxu0 0.0
  %96 = vmatprep.subr.mxu0 0.0
  %97 = vmatpush1.msra.mxu0 0.0
  %98 = vmatprep.subr.mxu0 0.0
  %99 = vmatpush1.msra.mxu0 0.0
  %100 = vmatprep.subr.mxu0 0.0
  %101 = vmatpush1.msra.mxu0 0.0
  %102 = vmatprep.subr.mxu0 0.0
  %103 = vmatpush1.msra.mxu0 0.0
  %104 = vmatprep.subr.mxu0 0.0
  %105 = vmatpush1.msra.mxu0 0.0
  %106 = vmatprep.subr.mxu0 0.0
  %107 = vmatpush1.msra.mxu0 0.0
  %108 = vmatprep.subr.mxu0 0.0
  %109 = vmatpush1.msra.mxu0 0.0
  %110 = vmatprep.subr.mxu0 0.0
  %111 = vmatpush1.msra.mxu0 0.0
  %112 = vmatprep.subr.mxu0 0.0
  %113 = vmatpush1.msra.mxu0 0.0
  %114 = vmatprep.mubr.f32.mxu0 0.0
  %115 = vmatmul.mubr.f32.gmra.mrb[0].mxu0 %v39
  %v116 = vpop.f32.mrb[0].mxu0
  %v117 = vadd.f32 %v35, %v116
  %v118 = vpop.f32.mrb[0].mxu0
  %119 = vmatprep.mubr.f32.mxu0 0.0
  %120 = vmatmul.mubr.f32.gmra.mrb[0].mxu0 %v42
  %v121 = vpop.f32.mrb[0].mxu0
  %v122 = vadd.f32 %v35, %v121
  %v123 = vpop.f32.mrb[0].mxu0
  %124 = vmatprep.mubr.f32.mxu0 0.0
  %125 = vmatmul.mubr.f32.gmra.mrb[0].mxu0 %v45
  %v126 = vpop.f32.mrb[0].mxu0
  %v127 = vadd.f32 %v35, %v126
  %v128 = vpop.f32.mrb[0].mxu0
  %129 = vmatprep.mubr.f32.mxu0 0.0
  %130 = vmatmul.mubr.f32.gmra.mrb[0].mxu0 %v48
  %v131 = vpop.f32.mrb[0].mxu0
  %v132 = vadd.f32 %v35, %v131
  %v133 = vpop.f32.mrb[0].mxu0
  %134 = vdwg.mxu0
  %135 = vst [vmem:[%s3] sm:$0xff] %v117
  %136 = vst [vmem:[%s3 + $0x8] sm:$0xff] %v122
  %137 = vst [vmem:[%s3 + $0x10] sm:$0xff] %v127
  %138 = vst [vmem:[%s3 + $0x18] sm:$0xff] %v132
  // Predicated region
  $region14: #{pointsift_res_forward.2} parent=0 // pred_check
    _
  $region15: #{pointsift_res_forward.2} parent=0 // pred_check_branch
    %140 = sbr.rel (0) target = $region17
  $region16: #{pointsift_res_forward.2} parent=0 // pred_region
    _
  $region17: #{pointsift_res_forward.2} parent=0 // pred_fallthru
    _
  // Predicated region
  $region18: #{pointsift_res_forward.2} parent=0 // pred_check
    _
  $region19: #{pointsift_res_forward.2} parent=0 // pred_check_branch
    %142 = sbr.rel (0) target = $region21
  $region20: #{pointsift_res_forward.2} parent=0 // pred_region
    _
  $region21: #{pointsift_res_forward.2} parent=0 // pred_fallthru
    _

// kernel: pointsift_res_forward.3
$region0: #{pointsift_res_forward.3}
  #allocation0 [shape = 'u32[]', space=smem, size = 0x4, offset = 0x4, fixed_abs, tag = 'smem constant byte address 0x4 - core index']
  #allocation1 [shape = 'u32[144,128]{1,0:T(1,128)}', space=vmem, size = 0x12000, scoped, tag = 'internal scratch']
  %s0 = inlined_call_operand.vmem [shape: f32[32,1072], index: 0, kind: input, shape index: {}]
  %s1 = inlined_call_operand.vmem [shape: f32[1072,128], index: 1, kind: input, shape index: {}]
  %s2 = inlined_call_operand.vmem [shape: f32[1,128], index: 2, kind: input, shape index: {}]
  %s3 = inlined_call_operand.vmem [shape: f32[32,128], index: 3, kind: output, shape index: {}]
  %s4 = sld [smem:[#allocation0]]
  $region22: #{pointsift_res_forward.3} parent=0
    _
  %s6 = ssub.s32 1, %s4
  %s7 = scalar_select 0, %s6, %s4
  // Predicated region
  $region2: #{pointsift_res_forward.3} parent=0 // pred_check
    _
  $region3: #{pointsift_res_forward.3} parent=0 // pred_check_branch
    %9 = sbr.rel (0) target = $region5
  $region4: #{pointsift_res_forward.3} parent=0 // pred_region
    _
  $region5: #{pointsift_res_forward.3} parent=0 // pred_fallthru
    _
  // Predicated region
  $region6: #{pointsift_res_forward.3} parent=0 // pred_check
    _
  $region7: #{pointsift_res_forward.3} parent=0 // pred_check_branch
    %11 = sbr.rel (0) target = $region9
  $region8: #{pointsift_res_forward.3} parent=0 // pred_region
    _
  $region9: #{pointsift_res_forward.3} parent=0 // pred_fallthru
    _
  // Predicated region
  $region10: #{pointsift_res_forward.3} parent=0 // pred_check
    _
  $region11: #{pointsift_res_forward.3} parent=0 // pred_check_branch
    %13 = sbr.rel (0) target = $region13
  $region12: #{pointsift_res_forward.3} parent=0 // pred_region
    _
  $region13: #{pointsift_res_forward.3} parent=0 // pred_fallthru
    _
  %v14 = vld [vmem:[%s0] sm:$0xff]
  %v15 = vld [vmem:[%s0 + $0x8] sm:$0xff]
  %v16 = vld [vmem:[%s0 + $0x10] sm:$0xff]
  %v17 = vld [vmem:[%s0 + $0x18] sm:$0xff]
  %v18 = vld [vmem:[%s0 + $0x20] sm:$0xff]
  %v19 = vld [vmem:[%s0 + $0x28] sm:$0xff]
  %v20 = vld [vmem:[%s0 + $0x30] sm:$0xff]
  %v21 = vld [vmem:[%s0 + $0x38] sm:$0xff]
  %v22 = vld [vmem:[%s0 + $0x40] sm:$0xff]
  %v23 = vld [vmem:[%s0 + $0x48] sm:$0xff]
  %v24 = vld [vmem:[%s0 + $0x50] sm:$0xff]
  %v25 = vld [vmem:[%s0 + $0x58] sm:$0xff]
  %v26 = vld [vmem:[%s0 + $0x60] sm:$0xff]
  %v27 = vld [vmem:[%s0 + $0x68] sm:$0xff]
  %v28 = vld [vmem:[%s0 + $0x70] sm:$0xff]
  %v29 = vld [vmem:[%s0 + $0x78] sm:$0xff]
  %v30 = vld [vmem:[%s0 + $0x80] sm:$0xff]
  %v31 = vld [vmem:[%s0 + $0x88] sm:$0xff]
  %v32 = vld [vmem:[%s0 + $0x90] sm:$0xff]
  %v33 = vld [vmem:[%s0 + $0x98] sm:$0xff]
  %v34 = vld [vmem:[%s0 + $0xa0] sm:$0xff]
  %v35 = vld [vmem:[%s0 + $0xa8] sm:$0xff]
  %v36 = vld [vmem:[%s0 + $0xb0] sm:$0xff]
  %v37 = vld [vmem:[%s0 + $0xb8] sm:$0xff]
  %v38 = vld [vmem:[%s0 + $0xc0] sm:$0xff]
  %v39 = vld [vmem:[%s0 + $0xc8] sm:$0xff]
  %v40 = vld [vmem:[%s0 + $0xd0] sm:$0xff]
  %v41 = vld [vmem:[%s0 + $0xd8] sm:$0xff]
  %v42 = vld [vmem:[%s0 + $0xe0] sm:$0xff]
  %v43 = vld [vmem:[%s0 + $0xe8] sm:$0xff]
  %v44 = vld [vmem:[%s0 + $0xf0] sm:$0xff]
  %v45 = vld [vmem:[%s0 + $0xf8] sm:$0xff]
  %v46 = vld [vmem:[%s0 + $0x100] sm:$0xff]
  %v47 = vld [vmem:[%s0 + $0x108] sm:$0xff]
  %v48 = vld [vmem:[%s0 + $0x110] sm:$0xff]
  %v49 = vld [vmem:[%s0 + $0x118] sm:$0xff]
  %v50 = vld [vmem:[%s1] sm:$0xff]
  %v51 = vld [vmem:[%s1 + $0x8] sm:$0xff]
  %v52 = vld [vmem:[%s1 + $0x10] sm:$0xff]
  %v53 = vld [vmem:[%s1 + $0x18] sm:$0xff]
  %v54 = vld [vmem:[%s1 + $0x20] sm:$0xff]
  %v55 = vld [vmem:[%s1 + $0x28] sm:$0xff]
  %v56 = vld [vmem:[%s1 + $0x30] sm:$0xff]
  %v57 = vld [vmem:[%s1 + $0x38] sm:$0xff]
  %v58 = vld [vmem:[%s1 + $0x40] sm:$0xff]
  %v59 = vld [vmem:[%s1 + $0x48] sm:$0xff]
  %v60 = vld [vmem:[%s1 + $0x50] sm:$0xff]
  %v61 = vld [vmem:[%s1 + $0x58] sm:$0xff]
  %v62 = vld [vmem:[%s1 + $0x60] sm:$0xff]
  %v63 = vld [vmem:[%s1 + $0x68] sm:$0xff]
  %v64 = vld [vmem:[%s1 + $0x70] sm:$0xff]
  %v65 = vld [vmem:[%s1 + $0x78] sm:$0xff]
  %v66 = vld [vmem:[%s1 + $0x80] sm:$0xff]
  %v67 = vld [vmem:[%s1 + $0x88] sm:$0xff]
  %v68 = vld [vmem:[%s1 + $0x90] sm:$0xff]
  %v69 = vld [vmem:[%s1 + $0x98] sm:$0xff]
  %v70 = vld [vmem:[%s1 + $0xa0] sm:$0xff]
  %v71 = vld [vmem:[%s1 + $0xa8] sm:$0xff]
  %v72 = vld [vmem:[%s1 + $0xb0] sm:$0xff]
  %v73 = vld [vmem:[%s1 + $0xb8] sm:$0xff]
  %v74 = vld [vmem:[%s1 + $0xc0] sm:$0xff]
  %v75 = vld [vmem:[%s1 + $0xc8] sm:$0xff]
  %v76 = vld [vmem:[%s1 + $0xd0] sm:$0xff]
  %v77 = vld [vmem:[%s1 + $0xd8] sm:$0xff]
  %v78 = vld [vmem:[%s1 + $0xe0] sm:$0xff]
  %v79 = vld [vmem:[%s1 + $0xe8] sm:$0xff]
  %v80 = vld [vmem:[%s1 + $0xf0] sm:$0xff]
  %v81 = vld [vmem:[%s1 + $0xf8] sm:$0xff]
  %v82 = vld [vmem:[%s1 + $0x100] sm:$0xff]
  %v83 = vld [vmem:[%s1 + $0x108] sm:$0xff]
  %v84 = vld [vmem:[%s1 + $0x110] sm:$0xff]
  %v85 = vld [vmem:[%s1 + $0x118] sm:$0xff]
  %v86 = vld [vmem:[%s1 + $0x120] sm:$0xff]
  %v87 = vld [vmem:[%s1 + $0x128] sm:$0xff]
  %v88 = vld [vmem:[%s1 + $0x130] sm:$0xff]
  %v89 = vld [vmem:[%s1 + $0x138] sm:$0xff]
  %v90 = vld [vmem:[%s1 + $0x140] sm:$0xff]
  %v91 = vld [vmem:[%s1 + $0x148] sm:$0xff]
  %v92 = vld [vmem:[%s1 + $0x150] sm:$0xff]
  %v93 = vld [vmem:[%s1 + $0x158] sm:$0xff]
  %v94 = vld [vmem:[%s1 + $0x160] sm:$0xff]
  %v95 = vld [vmem:[%s1 + $0x168] sm:$0xff]
  %v96 = vld [vmem:[%s1 + $0x170] sm:$0xff]
  %v97 = vld [vmem:[%s1 + $0x178] sm:$0xff]
  %v98 = vld [vmem:[%s1 + $0x180] sm:$0xff]
  %v99 = vld [vmem:[%s1 + $0x188] sm:$0xff]
  %v100 = vld [vmem:[%s1 + $0x190] sm:$0xff]
  %v101 = vld [vmem:[%s1 + $0x198] sm:$0xff]
  %v102 = vld [vmem:[%s1 + $0x1a0] sm:$0xff]
  %v103 = vld [vmem:[%s1 + $0x1a8] sm:$0xff]
  %v104 = vld [vmem:[%s1 + $0x1b0] sm:$0xff]
  %v105 = vld [vmem:[%s1 + $0x1b8] sm:$0xff]
  %v106 = vld [vmem:[%s1 + $0x1c0] sm:$0xff]
  %v107 = vld [vmem:[%s1 + $0x1c8] sm:$0xff]
  %v108 = vld [vmem:[%s1 + $0x1d0] sm:$0xff]
  %v109 = vld [vmem:[%s1 + $0x1d8] sm:$0xff]
  %v110 = vld [vmem:[%s1 + $0x1e0] sm:$0xff]
  %v111 = vld [vmem:[%s1 + $0x1e8] sm:$0xff]
  %v112 = vld [vmem:[%s1 + $0x1f0] sm:$0xff]
  %v113 = vld [vmem:[%s1 + $0x1f8] sm:$0xff]
  %v114 = vld [vmem:[%s1 + $0x200] sm:$0xff]
  %v115 = vld [vmem:[%s1 + $0x208] sm:$0xff]
  %v116 = vld [vmem:[%s1 + $0x210] sm:$0xff]
  %v117 = vld [vmem:[%s1 + $0x218] sm:$0xff]
  %v118 = vld [vmem:[%s1 + $0x220] sm:$0xff]
  %v119 = vld [vmem:[%s1 + $0x228] sm:$0xff]
  %v120 = vld [vmem:[%s1 + $0x230] sm:$0xff]
  %v121 = vld [vmem:[%s1 + $0x238] sm:$0xff]
  %v122 = vld [vmem:[%s1 + $0x240] sm:$0xff]
  %v123 = vld [vmem:[%s1 + $0x248] sm:$0xff]
  %v124 = vld [vmem:[%s1 + $0x250] sm:$0xff]
  %v125 = vld [vmem:[%s1 + $0x258] sm:$0xff]
  %v126 = vld [vmem:[%s1 + $0x260] sm:$0xff]
  %v127 = vld [vmem:[%s1 + $0x268] sm:$0xff]
  %v128 = vld [vmem:[%s1 + $0x270] sm:$0xff]
  %v129 = vld [vmem:[%s1 + $0x278] sm:$0xff]
  %v130 = vld [vmem:[%s1 + $0x280] sm:$0xff]
  %v131 = vld [vmem:[%s1 + $0x288] sm:$0xff]
  %v132 = vld [vmem:[%s1 + $0x290] sm:$0xff]
  %v133 = vld [vmem:[%s1 + $0x298] sm:$0xff]
  %v134 = vld [vmem:[%s1 + $0x2a0] sm:$0xff]
  %v135 = vld [vmem:[%s1 + $0x2a8] sm:$0xff]
  %v136 = vld [vmem:[%s1 + $0x2b0] sm:$0xff]
  %v137 = vld [vmem:[%s1 + $0x2b8] sm:$0xff]
  %v138 = vld [vmem:[%s1 + $0x2c0] sm:$0xff]
  %v139 = vld [vmem:[%s1 + $0x2c8] sm:$0xff]
  %v140 = vld [vmem:[%s1 + $0x2d0] sm:$0xff]
  %v141 = vld [vmem:[%s1 + $0x2d8] sm:$0xff]
  %v142 = vld [vmem:[%s1 + $0x2e0] sm:$0xff]
  %v143 = vld [vmem:[%s1 + $0x2e8] sm:$0xff]
  %v144 = vld [vmem:[%s1 + $0x2f0] sm:$0xff]
  %v145 = vld [vmem:[%s1 + $0x2f8] sm:$0xff]
  %v146 = vld [vmem:[%s1 + $0x300] sm:$0xff]
  %v147 = vld [vmem:[%s1 + $0x308] sm:$0xff]
  %v148 = vld [vmem:[%s1 + $0x310] sm:$0xff]
  %v149 = vld [vmem:[%s1 + $0x318] sm:$0xff]
  %v150 = vld [vmem:[%s1 + $0x320] sm:$0xff]
  %v151 = vld [vmem:[%s1 + $0x328] sm:$0xff]
  %v152 = vld [vmem:[%s1 + $0x330] sm:$0xff]
  %v153 = vld [vmem:[%s1 + $0x338] sm:$0xff]
  %v154 = vld [vmem:[%s1 + $0x340] sm:$0xff]
  %v155 = vld [vmem:[%s1 + $0x348] sm:$0xff]
  %v156 = vld [vmem:[%s1 + $0x350] sm:$0xff]
  %v157 = vld [vmem:[%s1 + $0x358] sm:$0xff]
  %v158 = vld [vmem:[%s1 + $0x360] sm:$0xff]
  %v159 = vld [vmem:[%s1 + $0x368] sm:$0xff]
  %v160 = vld [vmem:[%s1 + $0x370] sm:$0xff]
  %v161 = vld [vmem:[%s1 + $0x378] sm:$0xff]
  %v162 = vld [vmem:[%s1 + $0x380] sm:$0xff]
  %v163 = vld [vmem:[%s1 + $0x388] sm:$0xff]
  %v164 = vld [vmem:[%s1 + $0x390] sm:$0xff]
  %v165 = vld [vmem:[%s1 + $0x398] sm:$0xff]
  %v166 = vld [vmem:[%s1 + $0x3a0] sm:$0xff]
  %v167 = vld [vmem:[%s1 + $0x3a8] sm:$0xff]
  %v168 = vld [vmem:[%s1 + $0x3b0] sm:$0xff]
  %v169 = vld [vmem:[%s1 + $0x3b8] sm:$0xff]
  %v170 = vld [vmem:[%s1 + $0x3c0] sm:$0xff]
  %v171 = vld [vmem:[%s1 + $0x3c8] sm:$0xff]
  %v172 = vld [vmem:[%s1 + $0x3d0] sm:$0xff]
  %v173 = vld [vmem:[%s1 + $0x3d8] sm:$0xff]
  %v174 = vld [vmem:[%s1 + $0x3e0] sm:$0xff]
  %v175 = vld [vmem:[%s1 + $0x3e8] sm:$0xff]
  %v176 = vld [vmem:[%s1 + $0x3f0] sm:$0xff]
  %v177 = vld [vmem:[%s1 + $0x3f8] sm:$0xff]
  %v178 = vld [vmem:[%s1 + $0x400] sm:$0xff]
  %v179 = vld [vmem:[%s1 + $0x408] sm:$0xff]
  %v180 = vld [vmem:[%s1 + $0x410] sm:$0xff]
  %v181 = vld [vmem:[%s1 + $0x418] sm:$0xff]
  %v182 = vld [vmem:[%s1 + $0x420] sm:$0xff]
  %v183 = vld [vmem:[%s1 + $0x428] sm:$0xff]
  %v184 = vld [vmem:[%s2] sm:$0x1]
  %v186 = vlaneseq
  %v187 = vshrl.u32 %v186, 7
  %v188 = vsub.s32 0, %v187
  %v189 = vrot.slane %v184, %v188
  %vm191 = vcmask 392192
  %v193 = vsel %vm191, %v22, 0
  %v196 = vsel %vm191, %v31, 0
  %v199 = vsel %vm191, %v40, 0
  %v202 = vsel %vm191, %v49, 0
  %204 = vmatprep.subr.mxu0 0.0
  %205 = vmatpush1.msra.mxu0 %v50
  %206 = vmatprep.subr.mxu0 0.0
  %207 = vmatpush1.msra.mxu0 %v51
  %208 = vmatprep.subr.mxu0 0.0
  %209 = vmatpush1.msra.mxu0 %v52
  %210 = vmatprep.subr.mxu0 0.0
  %211 = vmatpush1.msra.mxu0 %v53
  %212 = vmatprep.subr.mxu0 0.0
  %213 = vmatpush1.msra.mxu0 %v54
  %214 = vmatprep.subr.mxu0 0.0
  %215 = vmatpush1.msra.mxu0 %v55
  %216 = vmatprep.subr.mxu0 0.0
  %217 = vmatpush1.msra.mxu0 %v56
  %218 = vmatprep.subr.mxu0 0.0
  %219 = vmatpush1.msra.mxu0 %v57
  %220 = vmatprep.subr.mxu0 0.0
  %221 = vmatpush1.msra.mxu0 %v58
  %222 = vmatprep.subr.mxu0 0.0
  %223 = vmatpush1.msra.mxu0 %v59
  %224 = vmatprep.subr.mxu0 0.0
  %225 = vmatpush1.msra.mxu0 %v60
  %226 = vmatprep.subr.mxu0 0.0
  %227 = vmatpush1.msra.mxu0 %v61
  %228 = vmatprep.subr.mxu0 0.0
  %229 = vmatpush1.msra.mxu0 %v62
  %230 = vmatprep.subr.mxu0 0.0
  %231 = vmatpush1.msra.mxu0 %v63
  %232 = vmatprep.subr.mxu0 0.0
  %233 = vmatpush1.msra.mxu0 %v64
  %234 = vmatprep.subr.mxu0 0.0
  %235 = vmatpush1.msra.mxu0 %v65
  %236 = vmatprep.subr.mxu0 0.0
  %237 = vmatpush1.msra.mxu0 %v66
  %238 = vmatprep.subr.mxu0 0.0
  %239 = vmatpush1.msra.mxu0 %v67
  %240 = vmatprep.subr.mxu0 0.0
  %241 = vmatpush1.msra.mxu0 %v68
  %242 = vmatprep.subr.mxu0 0.0
  %243 = vmatpush1.msra.mxu0 %v69
  %244 = vmatprep.subr.mxu0 0.0
  %245 = vmatpush1.msra.mxu0 %v70
  %246 = vmatprep.subr.mxu0 0.0
  %247 = vmatpush1.msra.mxu0 %v71
  %248 = vmatprep.subr.mxu0 0.0
  %249 = vmatpush1.msra.mxu0 %v72
  %250 = vmatprep.subr.mxu0 0.0
  %251 = vmatpush1.msra.mxu0 %v73
  %252 = vmatprep.subr.mxu0 0.0
  %253 = vmatpush1.msra.mxu0 %v74
  %254 = vmatprep.subr.mxu0 0.0
  %255 = vmatpush1.msra.mxu0 %v75
  %256 = vmatprep.subr.mxu0 0.0
  %257 = vmatpush1.msra.mxu0 %v76
  %258 = vmatprep.subr.mxu0 0.0
  %259 = vmatpush1.msra.mxu0 %v77
  %260 = vmatprep.subr.mxu0 0.0
  %261 = vmatpush1.msra.mxu0 %v78
  %262 = vmatprep.subr.mxu0 0.0
  %263 = vmatpush1.msra.mxu0 %v79
  %264 = vmatprep.subr.mxu0 0.0
  %265 = vmatpush1.msra.mxu0 %v80
  %266 = vmatprep.subr.mxu0 0.0
  %267 = vmatpush1.msra.mxu0 %v81
  %268 = vmatprep.mubr.f32.mxu0 %v15
  %269 = vmatmul.mubr.f32.gmra.mrb[0].mxu0 %v14
  %v270 = vpop.f32.mrb[0].mxu0
  %v271 = vadd.f32 %v189, %v270
  %v272 = vpop.f32.mrb[0].mxu0
  %273 = vmatprep.mubr.f32.mxu0 %v24
  %274 = vmatmul.mubr.f32.gmra.mrb[0].mxu0 %v23
  %v275 = vpop.f32.mrb[0].mxu0
  %v276 = vadd.f32 %v189, %v275
  %v277 = vpop.f32.mrb[0].mxu0
  %278 = vmatprep.mubr.f32.mxu0 %v33
  %279 = vmatmul.mubr.f32.gmra.mrb[0].mxu0 %v32
  %v280 = vpop.f32.mrb[0].mxu0
  %v281 = vadd.f32 %v189, %v280
  %v282 = vpop.f32.mrb[0].mxu0
  %283 = vmatprep.mubr.f32.mxu0 %v42
  %284 = vmatmul.mubr.f32.gmra.mrb[0].mxu0 %v41
  %v285 = vpop.f32.mrb[0].mxu0
  %v286 = vadd.f32 %v189, %v285
  %v287 = vpop.f32.mrb[0].mxu0
  %288 = vdwg.mxu0
  %289 = vmatprep.subr.mxu0 0.0
  %290 = vmatpush1.msra.mxu0 %v82
  %291 = vmatprep.subr.mxu0 0.0
  %292 = vmatpush1.msra.mxu0 %v83
  %293 = vmatprep.subr.mxu0 0.0
  %294 = vmatpush1.msra.mxu0 %v84
  %295 = vmatprep.subr.mxu0 0.0
  %296 = vmatpush1.msra.mxu0 %v85
  %297 = vmatprep.subr.mxu0 0.0
  %298 = vmatpush1.msra.mxu0 %v86
  %299 = vmatprep.subr.mxu0 0.0
  %300 = vmatpush1.msra.mxu0 %v87
  %301 = vmatprep.subr.mxu0 0.0
  %302 = vmatpush1.msra.mxu0 %v88
  %303 = vmatprep.subr.mxu0 0.0
  %304 = vmatpush1.msra.mxu0 %v89
  %305 = vmatprep.subr.mxu0 0.0
  %306 = vmatpush1.msra.mxu0 %v90
  %307 = vmatprep.subr.mxu0 0.0
  %308 = vmatpush1.msra.mxu0 %v91
  %309 = vmatprep.subr.mxu0 0.0
  %310 = vmatpush1.msra.mxu0 %v92
  %311 = vmatprep.subr.mxu0 0.0
  %312 = vmatpush1.msra.mxu0 %v93
  %313 = vmatprep.subr.mxu0 0.0
  %314 = vmatpush1.msra.mxu0 %v94
  %315 = vmatprep.subr.mxu0 0.0
  %316 = vmatpush1.msra.mxu0 %v95
  %317 = vmatprep.subr.mxu0 0.0
  %318 = vmatpush1.msra.mxu0 %v96
  %319 = vmatprep.subr.mxu0 0.0
  %320 = vmatpush1.msra.mxu0 %v97
  %321 = vmatprep.subr.mxu0 0.0
  %322 = vmatpush1.msra.mxu0 %v98
  %323 = vmatprep.subr.mxu0 0.0
  %324 = vmatpush1.msra.mxu0 %v99
  %325 = vmatprep.subr.mxu0 0.0
  %326 = vmatpush1.msra.mxu0 %v100
  %327 = vmatprep.subr.mxu0 0.0
  %328 = vmatpush1.msra.mxu0 %v101
  %329 = vmatprep.subr.mxu0 0.0
  %330 = vmatpush1.msra.mxu0 %v102
  %331 = vmatprep.subr.mxu0 0.0
  %332 = vmatpush1.msra.mxu0 %v103
  %333 = vmatprep.subr.mxu0 0.0
  %334 = vmatpush1.msra.mxu0 %v104
  %335 = vmatprep.subr.mxu0 0.0
  %336 = vmatpush1.msra.mxu0 %v105
  %337 = vmatprep.subr.mxu0 0.0
  %338 = vmatpush1.msra.mxu0 %v106
  %339 = vmatprep.subr.mxu0 0.0
  %340 = vmatpush1.msra.mxu0 %v107
  %341 = vmatprep.subr.mxu0 0.0
  %342 = vmatpush1.msra.mxu0 %v108
  %343 = vmatprep.subr.mxu0 0.0
  %344 = vmatpush1.msra.mxu0 %v109
  %345 = vmatprep.subr.mxu0 0.0
  %346 = vmatpush1.msra.mxu0 %v110
  %347 = vmatprep.subr.mxu0 0.0
  %348 = vmatpush1.msra.mxu0 %v111
  %349 = vmatprep.subr.mxu0 0.0
  %350 = vmatpush1.msra.mxu0 %v112
  %351 = vmatprep.subr.mxu0 0.0
  %352 = vmatpush1.msra.mxu0 %v113
  %353 = vmatprep.mubr.f32.mxu0 %v17
  %354 = vmatmul.mubr.f32.gmra.mrb[0].mxu0 %v16
  %v355 = vpop.f32.mrb[0].mxu0
  %v356 = vadd.f32 %v271, %v355
  %v357 = vpop.f32.mrb[0].mxu0
  %358 = vmatprep.mubr.f32.mxu0 %v26
  %359 = vmatmul.mubr.f32.gmra.mrb[0].mxu0 %v25
  %v360 = vpop.f32.mrb[0].mxu0
  %v361 = vadd.f32 %v276, %v360
  %v362 = vpop.f32.mrb[0].mxu0
  %363 = vmatprep.mubr.f32.mxu0 %v35
  %364 = vmatmul.mubr.f32.gmra.mrb[0].mxu0 %v34
  %v365 = vpop.f32.mrb[0].mxu0
  %v366 = vadd.f32 %v281, %v365
  %v367 = vpop.f32.mrb[0].mxu0
  %368 = vmatprep.mubr.f32.mxu0 %v44
  %369 = vmatmul.mubr.f32.gmra.mrb[0].mxu0 %v43
  %v370 = vpop.f32.mrb[0].mxu0
  %v371 = vadd.f32 %v286, %v370
  %v372 = vpop.f32.mrb[0].mxu0
  %373 = vdwg.mxu0
  %374 = vmatprep.subr.mxu0 0.0
  %375 = vmatpush1.msra.mxu0 %v114
  %376 = vmatprep.subr.mxu0 0.0
  %377 = vmatpush1.msra.mxu0 %v115
  %378 = vmatprep.subr.mxu0 0.0
  %379 = vmatpush1.msra.mxu0 %v116
  %380 = vmatprep.subr.mxu0 0.0
  %381 = vmatpush1.msra.mxu0 %v117
  %382 = vmatprep.subr.mxu0 0.0
  %383 = vmatpush1.msra.mxu0 %v118
  %384 = vmatprep.subr.mxu0 0.0
  %385 = vmatpush1.msra.mxu0 %v119
  %386 = vmatprep.subr.mxu0 0.0
  %387 = vmatpush1.msra.mxu0 %v120
  %388 = vmatprep.subr.mxu0 0.0
  %389 = vmatpush1.msra.mxu0 %v121
  %390 = vmatprep.subr.mxu0 0.0
  %391 = vmatpush1.msra.mxu0 %v122
  %392 = vmatprep.subr.mxu0 0.0
  %393 = vmatpush1.msra.mxu0 %v123
  %394 = vmatprep.subr.mxu0 0.0
  %395 = vmatpush1.msra.mxu0 %v124
  %396 = vmatprep.subr.mxu0 0.0
  %397 = vmatpush1.msra.mxu0 %v125
  %398 = vmatprep.subr.mxu0 0.0
  %399 = vmatpush1.msra.mxu0 %v126
  %400 = vmatprep.subr.mxu0 0.0
  %401 = vmatpush1.msra.mxu0 %v127
  %402 = vmatprep.subr.mxu0 0.0
  %403 = vmatpush1.msra.mxu0 %v128
  %404 = vmatprep.subr.mxu0 0.0
  %405 = vmatpush1.msra.mxu0 %v129
  %406 = vmatprep.subr.mxu0 0.0
  %407 = vmatpush1.msra.mxu0 %v130
  %408 = vmatprep.subr.mxu0 0.0
  %409 = vmatpush1.msra.mxu0 %v131
  %410 = vmatprep.subr.mxu0 0.0
  %411 = vmatpush1.msra.mxu0 %v132
  %412 = vmatprep.subr.mxu0 0.0
  %413 = vmatpush1.msra.mxu0 %v133
  %414 = vmatprep.subr.mxu0 0.0
  %415 = vmatpush1.msra.mxu0 %v134
  %416 = vmatprep.subr.mxu0 0.0
  %417 = vmatpush1.msra.mxu0 %v135
  %418 = vmatprep.subr.mxu0 0.0
  %419 = vmatpush1.msra.mxu0 %v136
  %420 = vmatprep.subr.mxu0 0.0
  %421 = vmatpush1.msra.mxu0 %v137
  %422 = vmatprep.subr.mxu0 0.0
  %423 = vmatpush1.msra.mxu0 %v138
  %424 = vmatprep.subr.mxu0 0.0
  %425 = vmatpush1.msra.mxu0 %v139
  %426 = vmatprep.subr.mxu0 0.0
  %427 = vmatpush1.msra.mxu0 %v140
  %428 = vmatprep.subr.mxu0 0.0
  %429 = vmatpush1.msra.mxu0 %v141
  %430 = vmatprep.subr.mxu0 0.0
  %431 = vmatpush1.msra.mxu0 %v142
  %432 = vmatprep.subr.mxu0 0.0
  %433 = vmatpush1.msra.mxu0 %v143
  %434 = vmatprep.subr.mxu0 0.0
  %435 = vmatpush1.msra.mxu0 %v144
  %436 = vmatprep.subr.mxu0 0.0
  %437 = vmatpush1.msra.mxu0 %v145
  %438 = vmatprep.mubr.f32.mxu0 %v19
  %439 = vmatmul.mubr.f32.gmra.mrb[0].mxu0 %v18
  %v440 = vpop.f32.mrb[0].mxu0
  %v441 = vadd.f32 %v356, %v440
  %v442 = vpop.f32.mrb[0].mxu0
  %443 = vmatprep.mubr.f32.mxu0 %v28
  %444 = vmatmul.mubr.f32.gmra.mrb[0].mxu0 %v27
  %v445 = vpop.f32.mrb[0].mxu0
  %v446 = vadd.f32 %v361, %v445
  %v447 = vpop.f32.mrb[0].mxu0
  %448 = vmatprep.mubr.f32.mxu0 %v37
  %449 = vmatmul.mubr.f32.gmra.mrb[0].mxu0 %v36
  %v450 = vpop.f32.mrb[0].mxu0
  %v451 = vadd.f32 %v366, %v450
  %v452 = vpop.f32.mrb[0].mxu0
  %453 = vmatprep.mubr.f32.mxu0 %v46
  %454 = vmatmul.mubr.f32.gmra.mrb[0].mxu0 %v45
  %v455 = vpop.f32.mrb[0].mxu0
  %v456 = vadd.f32 %v371, %v455
  %v457 = vpop.f32.mrb[0].mxu0
  %458 = vdwg.mxu0
  %459 = vmatprep.subr.mxu0 0.0
  %460 = vmatpush1.msra.mxu0 %v146
  %461 = vmatprep.subr.mxu0 0.0
  %462 = vmatpush1.msra.mxu0 %v147
  %463 = vmatprep.subr.mxu0 0.0
  %464 = vmatpush1.msra.mxu0 %v148
  %465 = vmatprep.subr.mxu0 0.0
  %466 = vmatpush1.msra.mxu0 %v149
  %467 = vmatprep.subr.mxu0 0.0
  %468 = vmatpush1.msra.mxu0 %v150
  %469 = vmatprep.subr.mxu0 0.0
  %470 = vmatpush1.msra.mxu0 %v151
  %471 = vmatprep.subr.mxu0 0.0
  %472 = vmatpush1.msra.mxu0 %v152
  %473 = vmatprep.subr.mxu0 0.0
  %474 = vmatpush1.msra.mxu0 %v153
  %475 = vmatprep.subr.mxu0 0.0
  %476 = vmatpush1.msra.mxu0 %v154
  %477 = vmatprep.subr.mxu0 0.0
  %478 = vmatpush1.msra.mxu0 %v155
  %479 = vmatprep.subr.mxu0 0.0
  %480 = vmatpush1.msra.mxu0 %v156
  %481 = vmatprep.subr.mxu0 0.0
  %482 = vmatpush1.msra.mxu0 %v157
  %483 = vmatprep.subr.mxu0 0.0
  %484 = vmatpush1.msra.mxu0 %v158
  %485 = vmatprep.subr.mxu0 0.0
  %486 = vmatpush1.msra.mxu0 %v159
  %487 = vmatprep.subr.mxu0 0.0
  %488 = vmatpush1.msra.mxu0 %v160
  %489 = vmatprep.subr.mxu0 0.0
  %490 = vmatpush1.msra.mxu0 %v161
  %491 = vmatprep.subr.mxu0 0.0
  %492 = vmatpush1.msra.mxu0 %v162
  %493 = vmatprep.subr.mxu0 0.0
  %494 = vmatpush1.msra.mxu0 %v163
  %495 = vmatprep.subr.mxu0 0.0
  %496 = vmatpush1.msra.mxu0 %v164
  %497 = vmatprep.subr.mxu0 0.0
  %498 = vmatpush1.msra.mxu0 %v165
  %499 = vmatprep.subr.mxu0 0.0
  %500 = vmatpush1.msra.mxu0 %v166
  %501 = vmatprep.subr.mxu0 0.0
  %502 = vmatpush1.msra.mxu0 %v167
  %503 = vmatprep.subr.mxu0 0.0
  %504 = vmatpush1.msra.mxu0 %v168
  %505 = vmatprep.subr.mxu0 0.0
  %506 = vmatpush1.msra.mxu0 %v169
  %507 = vmatprep.subr.mxu0 0.0
  %508 = vmatpush1.msra.mxu0 %v170
  %509 = vmatprep.subr.mxu0 0.0
  %510 = vmatpush1.msra.mxu0 %v171
  %511 = vmatprep.subr.mxu0 0.0
  %512 = vmatpush1.msra.mxu0 %v172
  %513 = vmatprep.subr.mxu0 0.0
  %514 = vmatpush1.msra.mxu0 %v173
  %515 = vmatprep.subr.mxu0 0.0
  %516 = vmatpush1.msra.mxu0 %v174
  %517 = vmatprep.subr.mxu0 0.0
  %518 = vmatpush1.msra.mxu0 %v175
  %519 = vmatprep.subr.mxu0 0.0
  %520 = vmatpush1.msra.mxu0 %v176
  %521 = vmatprep.subr.mxu0 0.0
  %522 = vmatpush1.msra.mxu0 %v177
  %523 = vmatprep.mubr.f32.mxu0 %v21
  %524 = vmatmul.mubr.f32.gmra.mrb[0].mxu0 %v20
  %v525 = vpop.f32.mrb[0].mxu0
  %v526 = vadd.f32 %v441, %v525
  %v527 = vpop.f32.mrb[0].mxu0
  %528 = vmatprep.mubr.f32.mxu0 %v30
  %529 = vmatmul.mubr.f32.gmra.mrb[0].mxu0 %v29
  %v530 = vpop.f32.mrb[0].mxu0
  %v531 = vadd.f32 %v446, %v530
  %v532 = vpop.f32.mrb[0].mxu0
  %533 = vmatprep.mubr.f32.mxu0 %v39
  %534 = vmatmul.mubr.f32.gmra.mrb[0].mxu0 %v38
  %v535 = vpop.f32.mrb[0].mxu0
  %v536 = vadd.f32 %v451, %v535
  %v537 = vpop.f32.mrb[0].mxu0
  %538 = vmatprep.mubr.f32.mxu0 %v48
  %539 = vmatmul.mubr.f32.gmra.mrb[0].mxu0 %v47
  %v540 = vpop.f32.mrb[0].mxu0
  %v541 = vadd.f32 %v456, %v540
  %v542 = vpop.f32.mrb[0].mxu0
  %543 = vdwg.mxu0
  %544 = vmatprep.subr.mxu0 0.0
  %545 = vmatpush1.msra.mxu0 %v178
  %546 = vmatprep.subr.mxu0 0.0
  %547 = vmatpush1.msra.mxu0 %v179
  %548 = vmatprep.subr.mxu0 0.0
  %549 = vmatpush1.msra.mxu0 %v180
  %550 = vmatprep.subr.mxu0 0.0
  %551 = vmatpush1.msra.mxu0 %v181
  %552 = vmatprep.subr.mxu0 0.0
  %553 = vmatpush1.msra.mxu0 %v182
  %554 = vmatprep.subr.mxu0 0.0
  %555 = vmatpush1.msra.mxu0 %v183
  %556 = vmatprep.subr.mxu0 0.0
  %557 = vmatpush1.msra.mxu0 0.0
  %558 = vmatprep.subr.mxu0 0.0
  %559 = vmatpush1.msra.mxu0 0.0
  %560 = vmatprep.subr.mxu0 0.0
  %561 = vmatpush1.msra.mxu0 0.0
  %562 = vmatprep.subr.mxu0 0.0
  %563 = vmatpush1.msra.mxu0 0.0
  %564 = vmatprep.subr.mxu0 0.0
  %565 = vmatpush1.msra.mxu0 0.0
  %566 = vmatprep.subr.mxu0 0.0
  %567 = vmatpush1.msra.mxu0 0.0
  %568 = vmatprep.subr.mxu0 0.0
  %569 = vmatpush1.msra.mxu0 0.0
  %570 = vmatprep.subr.mxu0 0.0
  %571 = vmatpush1.msra.mxu0 0.0
  %572 = vmatprep.subr.mxu0 0.0
  %573 = vmatpush1.msra.mxu0 0.0
  %574 = vmatprep.subr.mxu0 0.0
  %575 = vmatpush1.msra.mxu0 0.0
  %576 = vmatprep.subr.mxu0 0.0
  %577 = vmatpush1.msra.mxu0 0.0
  %578 = vmatprep.subr.mxu0 0.0
  %579 = vmatpush1.msra.mxu0 0.0
  %580 = vmatprep.subr.mxu0 0.0
  %581 = vmatpush1.msra.mxu0 0.0
  %582 = vmatprep.subr.mxu0 0.0
  %583 = vmatpush1.msra.mxu0 0.0
  %584 = vmatprep.subr.mxu0 0.0
  %585 = vmatpush1.msra.mxu0 0.0
  %586 = vmatprep.subr.mxu0 0.0
  %587 = vmatpush1.msra.mxu0 0.0
  %588 = vmatprep.subr.mxu0 0.0
  %589 = vmatpush1.msra.mxu0 0.0
  %590 = vmatprep.subr.mxu0 0.0
  %591 = vmatpush1.msra.mxu0 0.0
  %592 = vmatprep.subr.mxu0 0.0
  %593 = vmatpush1.msra.mxu0 0.0
  %594 = vmatprep.subr.mxu0 0.0
  %595 = vmatpush1.msra.mxu0 0.0
  %596 = vmatprep.subr.mxu0 0.0
  %597 = vmatpush1.msra.mxu0 0.0
  %598 = vmatprep.subr.mxu0 0.0
  %599 = vmatpush1.msra.mxu0 0.0
  %600 = vmatprep.subr.mxu0 0.0
  %601 = vmatpush1.msra.mxu0 0.0
  %602 = vmatprep.subr.mxu0 0.0
  %603 = vmatpush1.msra.mxu0 0.0
  %604 = vmatprep.subr.mxu0 0.0
  %605 = vmatpush1.msra.mxu0 0.0
  %606 = vmatprep.subr.mxu0 0.0
  %607 = vmatpush1.msra.mxu0 0.0
  %608 = vmatprep.mubr.f32.mxu0 0.0
  %609 = vmatmul.mubr.f32.gmra.mrb[0].mxu0 %v193
  %v610 = vpop.f32.mrb[0].mxu0
  %v611 = vadd.f32 %v526, %v610
  %v612 = vpop.f32.mrb[0].mxu0
  %613 = vmatprep.mubr.f32.mxu0 0.0
  %614 = vmatmul.mubr.f32.gmra.mrb[0].mxu0 %v196
  %v615 = vpop.f32.mrb[0].mxu0
  %v616 = vadd.f32 %v531, %v615
  %v617 = vpop.f32.mrb[0].mxu0
  %618 = vmatprep.mubr.f32.mxu0 0.0
  %619 = vmatmul.mubr.f32.gmra.mrb[0].mxu0 %v199
  %v620 = vpop.f32.mrb[0].mxu0
  %v621 = vadd.f32 %v536, %v620
  %v622 = vpop.f32.mrb[0].mxu0
  %623 = vmatprep.mubr.f32.mxu0 0.0
  %624 = vmatmul.mubr.f32.gmra.mrb[0].mxu0 %v202
  %v625 = vpop.f32.mrb[0].mxu0
  %v626 = vadd.f32 %v541, %v625
  %v627 = vpop.f32.mrb[0].mxu0
  %628 = vdwg.mxu0
  %v629 = vmax.f32 %v611, 0.0
  %v630 = vmax.f32 %v616, 0.0
  %v631 = vmax.f32 %v621, 0.0
  %v632 = vmax.f32 %v626, 0.0
  %633 = vst [vmem:[%s3] sm:$0xff] %v629
  %634 = vst [vmem:[%s3 + $0x8] sm:$0xff] %v630
  %635 = vst [vmem:[%s3 + $0x10] sm:$0xff] %v631
  %636 = vst [vmem:[%s3 + $0x18] sm:$0xff] %v632
  // Predicated region
  $region14: #{pointsift_res_forward.3} parent=0 // pred_check
    _
  $region15: #{pointsift_res_forward.3} parent=0 // pred_check_branch
    %638 = sbr.rel (0) target = $region17
  $region16: #{pointsift_res_forward.3} parent=0 // pred_region
    _
  $region17: #{pointsift_res_forward.3} parent=0 // pred_fallthru
    _
  // Predicated region
  $region18: #{pointsift_res_forward.3} parent=0 // pred_check
    _
  $region19: #{pointsift_res_forward.3} parent=0 // pred_check_branch
    %640 = sbr.rel (0) target = $region21
  $region20: #{pointsift_res_forward.3} parent=0 // pred_region
    _
  $region21: #{pointsift_res_forward.3} parent=0 // pred_fallthru
    _

</llo_original>
